<compile_context>
chip_gen: v5e
topology: v5e:2x2
jax: 0.10.0
libtpu: 0.0.40
codegen_flags: <defaults>
</compile_context>

<pallas_src>
import jax
import jax.numpy as jnp
from jax.experimental import pallas as pl
from jax.experimental.pallas import tpu as pltpu


_MAX_PARTIALS = 2  # leading "parallel" grid axis -> 2 TensorCores on v7x; harmless elsewhere


def _choose_tm(N, C):
    # 3 streamed [tm, C] f32 inputs, double-buffered; keep them under ~12 MiB so the kernel
    # fits v5e's 16 MiB default scoped-VMEM limit without extra compiler flags.
    budget = 12 * 1024 * 1024
    per_row = 3 * 2 * C * 4
    tm = (budget // per_row // 16) * 16
    tm = max(16, min(2048, tm))
    # never larger than the (16-rounded) number of rows we actually have
    return min(tm, max(16, pl.cdiv(N, 16) * 16))
    # TODO(synk): for very large C (where even tm=16 blows the VMEM budget), also tile the
    # class axis with a second "arbitrary" grid dimension feeding the same accumulator.


def _make_wbce_kernel(N, C, tm, bpc, ragged):
    def kernel(x_ref, t_ref, pw_ref, w_ref, cw_ref, acc_ref):
        c = pl.program_id(0)  # partial / core index        ("parallel")
        j = pl.program_id(1)  # row-block within the partial ("arbitrary", accumulator-resident)

        @pl.when(j == 0)
        def _init():
            acc_ref[...] = jnp.zeros_like(acc_ref)

        x = x_ref[...].astype(jnp.float32)
        t = t_ref[...].astype(jnp.float32)
        pw = pw_ref[...].astype(jnp.float32)   # [1, C] -> broadcasts over rows (sublanes)
        w = w_ref[...].astype(jnp.float32)     # [1, C] -> broadcasts over rows (sublanes)
        cw = cw_ref[...].astype(jnp.float32)   # [tm, C]

        # Numerically-stable BCE-with-logits, value-identical to the PyTorch reference:
        #   max_val = clamp(-x, 0);  max_val + log(exp(-max_val) + exp(-x - max_val))
        #   == max(-x, 0) + log(1 + exp(-|x|))          (1 exp + 1 log on the EUP)
        max_val = jnp.maximum(-x, 0.0)
        stable_log = max_val + jnp.log(1.0 + jnp.exp(-jnp.abs(x)))
        log_weight = 1.0 + (pw - 1.0) * t
        loss = (x - x * t + log_weight * stable_log) * w * cw

        if ragged:
            # Mask rows past N (ragged tail and/or clamped re-read blocks of an uneven split).
            row = jax.lax.broadcasted_iota(jnp.int32, (tm, 1), 0)
            global_row = (c * bpc + j) * tm + row
            loss = jnp.where(global_row < N, loss, 0.0)

        # Pure-VPU fold into the resident (8, C) accumulator block; the sublane-group split
        # reshape is layout-preserving (tm % 8 == 0), so no VMEM copy is materialized.
        acc_ref[...] += jnp.sum(loss.reshape(tm // 8, 8, C), axis=0)

    return kernel


def weighted_bce_logits_loss(x, target, pos_weight, weight, chr_weight, *, tm=None):
    """x, target, chr_weight: [N, C]; pos_weight, weight: [1, C]. Returns scalar mean loss.

    Inputs may be float32 or bfloat16; all arithmetic is performed in float32 in-kernel.
    """
    N, C = x.shape
    assert target.shape == (N, C) and chr_weight.shape == (N, C)
    assert pos_weight.shape == (1, C) and weight.shape == (1, C)

    if tm is None:
        tm = _choose_tm(N, C)
    assert tm % 16 == 0 and tm >= 16

    nb = pl.cdiv(N, tm)                           # row blocks covering the data
    num_partials = min(_MAX_PARTIALS, nb)         # don't spawn empty partials for small N
    bpc = pl.cdiv(nb, num_partials)               # row blocks assigned to each partial
    # Masking is only needed when a tile can contain rows >= N.
    ragged = (N % tm != 0) or (nb % num_partials != 0)

    def row_block(ci, ji):
        # Clamp so a partial whose range runs past the data re-reads a valid block
        # (its contribution is masked to zero inside the kernel).
        return (jnp.minimum(ci * bpc + ji, nb - 1), 0)

    kernel = _make_wbce_kernel(N, C, tm, bpc, ragged)

    partials = pl.pallas_call(
        kernel,
        out_shape=jax.ShapeDtypeStruct((num_partials * 8, C), jnp.float32),
        grid_spec=pltpu.PrefetchScalarGridSpec(
            num_scalar_prefetch=0,
            grid=(num_partials, bpc),
            in_specs=[
                pl.BlockSpec((tm, C), row_block),              # input logits
                pl.BlockSpec((tm, C), row_block),              # target
                pl.BlockSpec((1, C), lambda ci, ji: (0, 0)),   # pos_weight (resident)
                pl.BlockSpec((1, C), lambda ci, ji: (0, 0)),   # weight     (resident)
                pl.BlockSpec((tm, C), row_block),              # chr_weight
            ],
            # Per-partial (8, C) accumulator block, resident across the "arbitrary" axis.
            out_specs=pl.BlockSpec((8, C), lambda ci, ji: (ci, 0)),
        ),
        compiler_params=pltpu.CompilerParams(
            dimension_semantics=("parallel", "arbitrary")),
    )(x, target, pos_weight, weight, chr_weight)

    # Tiny epilogue in XLA: sum the num_partials*8*C partials and apply the mean
    # (size_average=True, reduce=True  ->  mean over all N*C elements).
    return jnp.sum(partials) * (1.0 / float(N * C))


def weighted_bce_logits_loss_module(input, target, pos_weight=None, weight=None, chr_weight=None):
    """Module-parity convenience: matches WeightedBCELogitsLoss.forward with optional args."""
    N, C = input.shape
    if pos_weight is None:
        pos_weight = jnp.ones((1, C), jnp.float32)
    if weight is None:
        weight = jnp.ones((1, C), jnp.float32)
    if chr_weight is None:
        # TODO(synk): specialize a 2-stream kernel variant when chr_weight is None to avoid
        # streaming an all-ones [N, C] array from HBM.
        chr_weight = jnp.ones((N, C), input.dtype)
    return weighted_bce_logits_loss(input, target, pos_weight, weight, chr_weight)


def _reference_loss(x, t, pw, w, cw):
    # Plain-JAX replica of chr_binary_cross_entropy_with_logits for verification.
    x = x.astype(jnp.float32)
    t = t.astype(jnp.float32)
    cw = cw.astype(jnp.float32)
    max_val = jnp.maximum(-x, 0.0)
    log_weight = 1.0 + (pw - 1.0) * t
    loss = x - x * t + log_weight * (max_val + jnp.log(jnp.exp(-max_val) + jnp.exp(-x - max_val)))
    loss = loss * w * cw
    return jnp.mean(loss)


def _run_case(key, N, C, tm=None):
    k1, k2, k3, k4, k5 = jax.random.split(key, 5)
    x = jax.random.normal(k1, (N, C), dtype=jnp.float32) * 2.0
    target = jax.random.bernoulli(k2, p=0.3, shape=(N, C)).astype(jnp.float32)
    pos_weight = jax.random.uniform(k3, (1, C), jnp.float32, 0.5, 3.0)
    weight = jax.random.uniform(k4, (1, C), jnp.float32, 0.5, 1.5)
    chr_weight = jax.random.uniform(k5, (N, C), jnp.float32, 0.5, 1.5)

    loss = weighted_bce_logits_loss(x, target, pos_weight, weight, chr_weight, tm=tm)
    loss = jax.block_until_ready(loss)
    ref = _reference_loss(x, target, pos_weight, weight, chr_weight)
    assert jnp.allclose(loss, ref, rtol=1e-5, atol=1e-5), (N, C, tm, loss, ref)
    return loss


if __name__ == "__main__":
    key = jax.random.PRNGKey(0)
    k_a, k_b, k_c, k_d = jax.random.split(key, 4)

    # Base case: [N, C] logits / one-hot-like targets, as the module implies (no mask path).
    _run_case(k_a, N=16, C=128)
    # Ragged N (exercises the partial-tile row mask).
    _run_case(k_b, N=20, C=128)
    # Multiple row blocks with an uneven 2-way split (exercises the clamped index + mask path).
    _run_case(k_c, N=40, C=128, tm=16)

    # Module-parity path with default (None) weights.
    x = jax.random.normal(k_d, (16, 128), dtype=jnp.float32)
    t = (x > 0.2).astype(jnp.float32)
    loss = jax.block_until_ready(weighted_bce_logits_loss_module(x, t))
    ones_c = jnp.ones((1, 128), jnp.float32)
    ref = _reference_loss(x, t, ones_c, ones_c, jnp.ones_like(x))
    assert jnp.allclose(loss, ref, rtol=1e-5, atol=1e-5)

    print("KERNEL_OK")
</pallas_src>

<mosaic_0001>
module attributes {stable_mosaic.version = 11 : i64} {
  func.func @kernel(%arg0: i32, %arg1: i32, %arg2: memref<16x128xf32, #tpu.memory_space<vmem>>, %arg3: memref<16x128xf32, #tpu.memory_space<vmem>>, %arg4: memref<1x128xf32, #tpu.memory_space<vmem>>, %arg5: memref<1x128xf32, #tpu.memory_space<vmem>>, %arg6: memref<16x128xf32, #tpu.memory_space<vmem>>, %arg7: memref<8x128xf32, #tpu.memory_space<vmem>>) attributes {dimension_semantics = [#tpu.dimension_semantics<parallel>, #tpu.dimension_semantics<arbitrary>], iteration_bounds = array<i64: 1, 1>, scalar_prefetch = 0 : i64, scratch_operands = 0 : i64, tpu.core_type = #tpu.core_type<tc>, window_params = [{transform_indices = @transform_0, window_bounds = array<i64: 16, 128>}, {transform_indices = @transform_1, window_bounds = array<i64: 16, 128>}, {pipeline_mode = #tpu.pipeline_mode<synchronous>, transform_indices = @transform_2, window_bounds = array<i64: 1, 128>}, {pipeline_mode = #tpu.pipeline_mode<synchronous>, transform_indices = @transform_3, window_bounds = array<i64: 1, 128>}, {transform_indices = @transform_4, window_bounds = array<i64: 16, 128>}, {transform_indices = @transform_5, window_bounds = array<i64: 8, 128>}]} {
    %c0_i32 = arith.constant 0 : i32
    %0 = arith.cmpi eq, %arg1, %c0_i32 : i32
    %1 = arith.extui %0 : i1 to i32
    %c0_i32_0 = arith.constant 0 : i32
    %2 = arith.cmpi ne, %1, %c0_i32_0 : i32
    scf.if %2 {
      %cst_20 = arith.constant 0.000000e+00 : f32
      %38 = vector.broadcast %cst_20 : f32 to vector<8x128xf32>
      %c0_21 = arith.constant 0 : index
      %c0_22 = arith.constant 0 : index
      %39 = vector.load %arg7[%c0_21, %c0_22] : memref<8x128xf32, #tpu.memory_space<vmem>>, vector<8x128xf32>
      tpu.vector_store %arg7[%c0_21, %c0_22], %38 {strides = array<i32>} : memref<8x128xf32, #tpu.memory_space<vmem>>, vector<8x128xf32>,
    } else {
    }
    %c0 = arith.constant 0 : index
    %c0_1 = arith.constant 0 : index
    %3 = vector.load %arg2[%c0, %c0_1] : memref<16x128xf32, #tpu.memory_space<vmem>>, vector<16x128xf32>
    %c0_2 = arith.constant 0 : index
    %c0_3 = arith.constant 0 : index
    %4 = vector.load %arg3[%c0_2, %c0_3] : memref<16x128xf32, #tpu.memory_space<vmem>>, vector<16x128xf32>
    %c0_4 = arith.constant 0 : index
    %c0_5 = arith.constant 0 : index
    %5 = vector.load %arg4[%c0_4, %c0_5] : memref<1x128xf32, #tpu.memory_space<vmem>>, vector<1x128xf32>
    %c0_6 = arith.constant 0 : index
    %c0_7 = arith.constant 0 : index
    %6 = vector.load %arg5[%c0_6, %c0_7] : memref<1x128xf32, #tpu.memory_space<vmem>>, vector<1x128xf32>
    %c0_8 = arith.constant 0 : index
    %c0_9 = arith.constant 0 : index
    %7 = vector.load %arg6[%c0_8, %c0_9] : memref<16x128xf32, #tpu.memory_space<vmem>>, vector<16x128xf32>
    %cst = arith.constant 0.000000e+00 : f32
    %8 = vector.broadcast %cst : f32 to vector<16x128xf32>
    %9 = arith.subf %8, %3 : vector<16x128xf32>
    %cst_10 = arith.constant 0.000000e+00 : f32
    %10 = vector.broadcast %cst_10 : f32 to vector<16x128xf32>
    %11 = arith.maximumf %9, %10 : vector<16x128xf32>
    %12 = math.absf %3 : vector<16x128xf32>
    %cst_11 = arith.constant 0.000000e+00 : f32
    %13 = vector.broadcast %cst_11 : f32 to vector<16x128xf32>
    %14 = arith.subf %13, %12 : vector<16x128xf32>
    %15 = math.exp %14 : vector<16x128xf32>
    %cst_12 = arith.constant 1.000000e+00 : f32
    %16 = vector.broadcast %cst_12 : f32 to vector<16x128xf32>
    %17 = arith.addf %16, %15 : vector<16x128xf32>
    %18 = math.log %17 : vector<16x128xf32>
    %19 = arith.addf %11, %18 : vector<16x128xf32>
    %cst_13 = arith.constant 1.000000e+00 : f32
    %20 = vector.broadcast %cst_13 : f32 to vector<1x128xf32>
    %21 = arith.subf %5, %20 : vector<1x128xf32>
    %22 = vector.broadcast %21 : vector<1x128xf32> to vector<16x128xf32>
    %23 = arith.mulf %22, %4 : vector<16x128xf32>
    %cst_14 = arith.constant 1.000000e+00 : f32
    %24 = vector.broadcast %cst_14 : f32 to vector<16x128xf32>
    %25 = arith.addf %24, %23 : vector<16x128xf32>
    %26 = arith.mulf %3, %4 : vector<16x128xf32>
    %27 = arith.subf %3, %26 : vector<16x128xf32>
    %28 = arith.mulf %25, %19 : vector<16x128xf32>
    %29 = arith.addf %27, %28 : vector<16x128xf32>
    %30 = vector.broadcast %6 : vector<1x128xf32> to vector<16x128xf32>
    %31 = arith.mulf %29, %30 : vector<16x128xf32>
    %32 = arith.mulf %31, %7 : vector<16x128xf32>
    %c0_15 = arith.constant 0 : index
    %c0_16 = arith.constant 0 : index
    %33 = vector.load %arg7[%c0_15, %c0_16] : memref<8x128xf32, #tpu.memory_space<vmem>>, vector<8x128xf32>
    %34 = vector.shape_cast %32 : vector<16x128xf32> to vector<2x8x128xf32>
    %cst_17 = arith.constant dense<0.000000e+00> : vector<8x128xf32>
    %35 = vector.multi_reduction <add>, %34, %cst_17 [0] : vector<2x8x128xf32> to vector<8x128xf32>
    %36 = arith.addf %33, %35 : vector<8x128xf32>
    %c0_18 = arith.constant 0 : index
    %c0_19 = arith.constant 0 : index
    %37 = vector.load %arg7[%c0_18, %c0_19] : memref<8x128xf32, #tpu.memory_space<vmem>>, vector<8x128xf32>
    tpu.vector_store %arg7[%c0_18, %c0_19], %36 {strides = array<i32>} : memref<8x128xf32, #tpu.memory_space<vmem>>, vector<8x128xf32>,
    return
  }
  func.func @transform_0(%arg0: i32, %arg1: i32) -> (i32, i32) {
    %c1_i32 = arith.constant 1 : i32
    %0 = arith.muli %arg0, %c1_i32 : i32
    %1 = arith.addi %0, %arg1 : i32
    %c0_i32 = arith.constant 0 : i32
    %2 = arith.minsi %1, %c0_i32 : i32
    %c0_i32_0 = arith.constant 0 : i32
    %c0_i32_1 = arith.constant 0 : i32
    return %2, %c0_i32_0 : i32, i32
  }
  func.func @transform_1(%arg0: i32, %arg1: i32) -> (i32, i32) {
    %c1_i32 = arith.constant 1 : i32
    %0 = arith.muli %arg0, %c1_i32 : i32
    %1 = arith.addi %0, %arg1 : i32
    %c0_i32 = arith.constant 0 : i32
    %2 = arith.minsi %1, %c0_i32 : i32
    %c0_i32_0 = arith.constant 0 : i32
    %c0_i32_1 = arith.constant 0 : i32
    return %2, %c0_i32_0 : i32, i32
  }
  func.func @transform_2(%arg0: i32, %arg1: i32) -> (i32, i32) {
    %c0_i32 = arith.constant 0 : i32
    %c0_i32_0 = arith.constant 0 : i32
    %c0_i32_1 = arith.constant 0 : i32
    return %c0_i32, %c0_i32_0 : i32, i32
  }
  func.func @transform_3(%arg0: i32, %arg1: i32) -> (i32, i32) {
    %c0_i32 = arith.constant 0 : i32
    %c0_i32_0 = arith.constant 0 : i32
    %c0_i32_1 = arith.constant 0 : i32
    return %c0_i32, %c0_i32_0 : i32, i32
  }
  func.func @transform_4(%arg0: i32, %arg1: i32) -> (i32, i32) {
    %c1_i32 = arith.constant 1 : i32
    %0 = arith.muli %arg0, %c1_i32 : i32
    %1 = arith.addi %0, %arg1 : i32
    %c0_i32 = arith.constant 0 : i32
    %2 = arith.minsi %1, %c0_i32 : i32
    %c0_i32_0 = arith.constant 0 : i32
    %c0_i32_1 = arith.constant 0 : i32
    return %2, %c0_i32_0 : i32, i32
  }
  func.func @transform_5(%arg0: i32, %arg1: i32) -> (i32, i32) {
    %c0_i32 = arith.constant 0 : i32
    %c0_i32_0 = arith.constant 0 : i32
    return %arg0, %c0_i32 : i32, i32
  }
}

</mosaic_0001>

<llo_original>
// kernel: tpu_custom_call.1
$region0: #{tpu_custom_call.1}
  #allocation0 [shape = 'u32[]', space=smem, size = 0x4, offset = 0x4, fixed_abs, tag = 'smem constant byte address 0x4 - core index']
  #allocation1 [shape = 'u32[72,128]{1,0:T(1,128)}', space=vmem, size = 0x9000, scoped, tag = 'internal scratch']
  %s0 = inlined_call_operand.hbm [shape: f32[16,128], index: 0, kind: input, shape index: {}]
  %s1 = inlined_call_operand.hbm [shape: f32[16,128], index: 1, kind: input, shape index: {}]
  %s2 = inlined_call_operand.vmem [shape: f32[1,128], index: 2, kind: input, shape index: {}]
  %s3 = inlined_call_operand.vmem [shape: f32[1,128], index: 3, kind: input, shape index: {}]
  %s4 = inlined_call_operand.hbm [shape: f32[16,128], index: 4, kind: input, shape index: {}]
  %s5 = inlined_call_operand.hbm [shape: f32[8,128], index: 5, kind: output, shape index: {}]
  %s6 = sld [smem:[#allocation0]]
  $region46: #{tpu_custom_call.1} parent=0
    _
  %s8 = ssub.s32 1, %s6
  %s9 = scalar_select 0, %s8, %s6
  $region1: #{tpu_custom_call.1} parent=0
    #allocation2 [shape = 'u8[8192]{0}', space=vmem, size = 0x2000, scoped, tag = 'input window, operand 0, single buffered']
    #allocation3 [shape = 's32[1]{0}', space=sflag, size = 0x4, scoped, tag = 'scoped memory for tpu_custom_call.1']
    #allocation4 [shape = 's32[1]{0}', space=sflag, size = 0x4, scoped, tag = 'scoped memory for tpu_custom_call.1']
    #allocation5 [shape = 'u8[8192]{0}', space=vmem, size = 0x2000, scoped, tag = 'input window, operand 1, single buffered']
    #allocation6 [shape = 's32[1]{0}', space=sflag, size = 0x4, scoped, tag = 'scoped memory for tpu_custom_call.1']
    #allocation7 [shape = 'u8[8192]{0}', space=vmem, size = 0x2000, scoped, tag = 'input window, operand 4, single buffered']
    #allocation8 [shape = 'u8[4096]{0}', space=vmem, size = 0x1000, scoped, tag = 'output window, operand 0, single buffered']
    %10 = vsyncpa [#allocation3], 0
    %11 = vsyncpa [#allocation6], 0
    %12 = vsyncpa [#allocation4], 0
    // Predicated region
    $region2: #{tpu_custom_call.1} parent=1 // pred_check
      _
    $region3: #{tpu_custom_call.1} parent=1 // pred_check_branch
      %14 = sbr.rel (0) target = $region5
    $region4: #{tpu_custom_call.1} parent=1 // pred_region
      %s15 = sadd.s32 0, 0
      %p16 = scmp.lt.s32.totalorder %s15, 0
      %s17 = scalar_select %p16, %s15, 0
      %s18 = smul.u32 2, %s17
      %20 = vsyncadd [#allocation3], 0
      %s21 = smul.addr %s18, 8
      %s22 = scalar_lea.hbm %s0, %s21
      %s23 = sshll.u32 %s22, 4
      %s24 = int_to_ptr.hbm [resolvable:$true] %s23
      %s25 = sshll.u32 [#allocation2], 4
      %s26 = int_to_ptr.vmem [resolvable:$true] %s25
      %31 = dma.hbm_to_vmem [thread:$0]  %s24, 256, %s26, [#allocation3], 128, 128, 8
    $region5: #{tpu_custom_call.1} parent=1 // pred_fallthru
      _
    // Predicated region
    $region6: #{tpu_custom_call.1} parent=1 // pred_check
      _
    $region7: #{tpu_custom_call.1} parent=1 // pred_check_branch
      %33 = sbr.rel (0) target = $region9
    $region8: #{tpu_custom_call.1} parent=1 // pred_region
      %s34 = sadd.s32 0, 0
      %p35 = scmp.lt.s32.totalorder %s34, 0
      %s36 = scalar_select %p35, %s34, 0
      %s37 = smul.u32 2, %s36
      %39 = vsyncadd [#allocation6], 0
      %s40 = smul.addr %s37, 8
      %s41 = scalar_lea.hbm %s1, %s40
      %s42 = sshll.u32 %s41, 4
      %s43 = int_to_ptr.hbm [resolvable:$true] %s42
      %s44 = sshll.u32 [#allocation5], 4
      %s45 = int_to_ptr.vmem [resolvable:$true] %s44
      %50 = dma.hbm_to_vmem [thread:$0]  %s43, 256, %s45, [#allocation6], 128, 128, 8
    $region9: #{tpu_custom_call.1} parent=1 // pred_fallthru
      _
    // Predicated region
    $region10: #{tpu_custom_call.1} parent=1 // pred_check
      _
    $region11: #{tpu_custom_call.1} parent=1 // pred_check_branch
      %52 = sbr.rel (0) target = $region13
    $region12: #{tpu_custom_call.1} parent=1 // pred_region
      _
    $region13: #{tpu_custom_call.1} parent=1 // pred_fallthru
      _
    // Predicated region
    $region14: #{tpu_custom_call.1} parent=1 // pred_check
      _
    $region15: #{tpu_custom_call.1} parent=1 // pred_check_branch
      %54 = sbr.rel (0) target = $region17
    $region16: #{tpu_custom_call.1} parent=1 // pred_region
      _
    $region17: #{tpu_custom_call.1} parent=1 // pred_fallthru
      _
    // Predicated region
    $region18: #{tpu_custom_call.1} parent=1 // pred_check
      _
    $region19: #{tpu_custom_call.1} parent=1 // pred_check_branch
      %56 = sbr.rel (0) target = $region21
    $region20: #{tpu_custom_call.1} parent=1 // pred_region
      %s57 = sadd.s32 0, 0
      %p58 = scmp.lt.s32.totalorder %s57, 0
      %s59 = scalar_select %p58, %s57, 0
      %s60 = smul.u32 2, %s59
      %62 = vsyncadd [#allocation6], 0
      %s63 = smul.addr %s60, 8
      %s64 = scalar_lea.hbm %s4, %s63
      %s65 = sshll.u32 %s64, 4
      %s66 = int_to_ptr.hbm [resolvable:$true] %s65
      %s67 = sshll.u32 [#allocation7], 4
      %s68 = int_to_ptr.vmem [resolvable:$true] %s67
      %73 = dma.hbm_to_vmem [thread:$0]  %s66, 256, %s68, [#allocation6], 128, 128, 8
    $region21: #{tpu_custom_call.1} parent=1 // pred_fallthru
      _
    // Predicated region
    $region22: #{tpu_custom_call.1} parent=1 // pred_check
      _
    $region23: #{tpu_custom_call.1} parent=1 // pred_check_branch
      %75 = sbr.rel (0) target = $region25
    $region24: #{tpu_custom_call.1} parent=1 // pred_region
      %77 = dma.done [#allocation3], 256
    $region25: #{tpu_custom_call.1} parent=1 // pred_fallthru
      _
    // Predicated region
    $region26: #{tpu_custom_call.1} parent=1 // pred_check
      _
    $region27: #{tpu_custom_call.1} parent=1 // pred_check_branch
      %79 = sbr.rel (0) target = $region29
    $region28: #{tpu_custom_call.1} parent=1 // pred_region
      %81 = dma.done [#allocation6], 256
    $region29: #{tpu_custom_call.1} parent=1 // pred_fallthru
      _
    // Predicated region
    $region30: #{tpu_custom_call.1} parent=1 // pred_check
      _
    $region31: #{tpu_custom_call.1} parent=1 // pred_check_branch
      %83 = sbr.rel (0) target = $region33
    $region32: #{tpu_custom_call.1} parent=1 // pred_region
      %85 = dma.done [#allocation6], 256
    $region33: #{tpu_custom_call.1} parent=1 // pred_fallthru
      _
    %s86 = sadd.s32 0, 0
    %p87 = scmp.lt.s32.totalorder %s86, 0
    %s88 = scalar_select %p87, %s86, 0
    %s89 = smul.u32 2, %s88
    %s90 = sadd.s32 0, 0
    %p91 = scmp.lt.s32.totalorder %s90, 0
    %s92 = scalar_select %p91, %s90, 0
    %s93 = smul.u32 2, %s92
    %s94 = sadd.s32 0, 0
    %p95 = scmp.lt.s32.totalorder %s94, 0
    %s96 = scalar_select %p95, %s94, 0
    %s97 = smul.u32 2, %s96
    %p98 = scmp.eq.s32.totalorder 0, 0
    // Predicated region
    $region34: #{tpu_custom_call.1} parent=1 // pred_check
      %p99 = pneg %p98
    $region35: #{tpu_custom_call.1} parent=1 // pred_check_branch
      %101 = sbr.rel (%p99) target = $region37
    $region36: #{tpu_custom_call.1} parent=1 // pred_region
      %102 = vst [vmem:[#allocation8] sm:$0xff] 0.0
    $region37: #{tpu_custom_call.1} parent=1 // pred_fallthru
      _
    %v103 = vld [vmem:[#allocation2] sm:$0xff]
    %v104 = vld [vmem:[#allocation2 + $0x8] sm:$0xff]
    %v105 = vld [vmem:[#allocation5] sm:$0xff]
    %v106 = vld [vmem:[#allocation5 + $0x8] sm:$0xff]
    %v107 = vld [vmem:[%s2] sm:$0x1]
    %v108 = vld [vmem:[%s3] sm:$0x1]
    %v109 = vld [vmem:[#allocation7] sm:$0xff]
    %v110 = vld [vmem:[#allocation7 + $0x8] sm:$0xff]
    %v111 = vsub.f32 0.0, %v103
    %v112 = vsub.f32 0.0, %v104
    %v113 = vmax.f32 %v111, 0.0
    %v114 = vmax.f32 %v112, 0.0
    %v115 = vand.u32 2147483647, %v103
    %v116 = vand.u32 2147483647, %v104
    %v117 = vsub.f32 0.0, %v115
    %v118 = vsub.f32 0.0, %v116
    %v119 = vmul.f32 %v117, 1.442695
    %v120 = vpow.pop %v119
    %v121 = vmul.f32 %v118, 1.442695
    %v122 = vpow.pop %v121
    %v123 = vadd.f32 %v120, 1.0
    %v124 = vadd.f32 %v122, 1.0
    %v125 = vlog2.pop %v123
    %v126 = vmul.f32 %v125, 0.6931472
    %v127 = vlog2.pop %v124
    %v128 = vmul.f32 %v127, 0.6931472
    %v129 = vadd.f32 %v113, %v126
    %v130 = vadd.f32 %v114, %v128
    %v131 = vsub.f32 %v107, 1.0
    %v133 = vperm.slane %v131, 0
    %v135 = vmul.f32 %v133, %v105
    %v136 = vmul.f32 %v133, %v106
    %v137 = vadd.f32 %v135, 1.0
    %v138 = vadd.f32 %v136, 1.0
    %v139 = vmul.f32 %v103, %v105
    %v140 = vmul.f32 %v104, %v106
    %v141 = vsub.f32 %v103, %v139
    %v142 = vsub.f32 %v104, %v140
    %v143 = vmul.f32 %v137, %v129
    %v144 = vmul.f32 %v138, %v130
    %v145 = vadd.f32 %v141, %v143
    %v146 = vadd.f32 %v142, %v144
    %v148 = vperm.slane %v108, 0
    %v150 = vmul.f32 %v145, %v148
    %v151 = vmul.f32 %v146, %v148
    %v152 = vmul.f32 %v150, %v109
    %v153 = vmul.f32 %v151, %v110
    %v154 = vld [vmem:[#allocation8] sm:$0xff]
    %v155 = vadd.f32 %v152, %v153
    %v156 = vadd.f32 %v154, %v155
    %157 = vst [vmem:[#allocation8] sm:$0xff] %v156
    // Predicated region
    $region38: #{tpu_custom_call.1} parent=1 // pred_check
      _
    $region39: #{tpu_custom_call.1} parent=1 // pred_check_branch
      %159 = sbr.rel (0) target = $region41
    $region40: #{tpu_custom_call.1} parent=1 // pred_region
      %161 = vsyncadd [#allocation4], 0
      %s163 = sshll.u32 [#allocation8], 4
      %s164 = int_to_ptr.vmem [resolvable:$true] %s163
      %s165 = sshll.u32 %s5, 4
      %s166 = int_to_ptr.hbm [resolvable:$true] %s165
      %168 = dma.vmem_to_hbm [thread:$0]  %s164, 128, %s166, [#allocation4]
    $region41: #{tpu_custom_call.1} parent=1 // pred_fallthru
      _
    // Predicated region
    $region42: #{tpu_custom_call.1} parent=1 // pred_check
      _
    $region43: #{tpu_custom_call.1} parent=1 // pred_check_branch
      %170 = sbr.rel (0) target = $region45
    $region44: #{tpu_custom_call.1} parent=1 // pred_region
      %172 = dma.done [#allocation4], 128
    $region45: #{tpu_custom_call.1} parent=1 // pred_fallthru
      _
    %173 = vsyncpa [#allocation3], 1
    %174 = vsyncpa [#allocation6], 1
    %175 = vsyncpa [#allocation4], 1

</llo_original>
